<compile_context>
chip_gen: v5e
topology: v5e:2x2
jax: 0.10.0
libtpu: 0.0.40
codegen_flags: <defaults>
</compile_context>

<pallas_src>
import jax
import jax.numpy as jnp
from jax.experimental import pallas as pl
from jax.experimental.pallas import tpu as pltpu


_LANES = 128
_SUBLANES = 8
# Working set per grid step ~ 2 (in + out) x 2 (double buffer) x TB x total_cols.
_VMEM_TILE_BUDGET = 16 * 1024 * 1024   # budget used to choose TB
_VMEM_LIMIT_BYTES = 32 * 1024 * 1024   # safe on v5e/v6e (128 MiB) and v7x (64 MiB)
_MAX_BATCH_TILE = 1024


def _concat_kernel(*refs):
    """refs = (*seg_refs, out_ref); seg_ref i is (TB, Ni), out_ref is (TB, sum Ni)."""
    *seg_refs, out_ref = refs
    off = 0
    for r in seg_refs:
        n = r.shape[1]
        # Static column window: copy this segment into its slot of the output.
        out_ref[:, off:off + n] = r[...].astype(out_ref.dtype)
        off += n


def _row_block_index(i):
    # Batch-tiled: block i along rows, single block along columns.
    return (i, 0)


def _pick_batch_tile(batch, total_cols, itemsize):
    """Largest multiple-of-8 batch tile whose pipelined working set
    (inputs + output, double-buffered) stays inside the VMEM budget."""
    per_row_bytes = 2 * 2 * total_cols * itemsize
    tile = _VMEM_TILE_BUDGET // max(per_row_bytes, 1)
    tile = max(_SUBLANES, (tile // _SUBLANES) * _SUBLANES)
    tile = min(tile, _MAX_BATCH_TILE)
    if batch <= tile:
        # Single block along batch; block dim == full array dim is always legal.
        return batch
    return tile


def _merge_narrow_segments(flats):
    """Merge runs of consecutive keys whose flattened width is < 128 lanes into
    one slab (cheap JAX glue) so the kernel writes lane-dense column windows
    wherever possible.  Preserves concatenation order exactly."""
    segments = []
    run = []
    for f in flats:
        if f.shape[1] < _LANES:
            run.append(f)
        else:
            if run:
                segments.append(run[0] if len(run) == 1 else jnp.concatenate(run, axis=1))
                run = []
            segments.append(f)
    if run:
        segments.append(run[0] if len(run) == 1 else jnp.concatenate(run, axis=1))
    return segments


def dict_extractor_forward(observations: dict):
    """Pallas implementation of DictExtractor.forward.

    observations: dict[str, jnp.ndarray], each with leading batch dim B.
    Returns (B, sum_i prod(obs_i.shape[1:])) concatenated in key insertion order.
    """
    keys = list(observations.keys())  # ModuleDict preserves insertion order
    flats = []
    for k in keys:
        x = observations[k]
        b = x.shape[0]
        flats.append(x.reshape(b, -1))  # nn.Flatten() equivalent (row-major)

    batch = flats[0].shape[0]
    # torch.cat type promotion across keys (no-op for uniform dtypes).
    out_dtype = jnp.result_type(*flats)
    flats = [f.astype(out_dtype) for f in flats]

    segments = _merge_narrow_segments(flats)
    widths = [s.shape[1] for s in segments]
    total = sum(widths)
    itemsize = jnp.dtype(out_dtype).itemsize

    tb = _pick_batch_tile(batch, total, itemsize)
    grid = (pl.cdiv(batch, tb),)

    in_specs = [pl.BlockSpec((tb, w), _row_block_index) for w in widths]
    out_spec = pl.BlockSpec((tb, total), _row_block_index)

    cost = pl.CostEstimate(
        flops=0,
        transcendentals=0,
        bytes_accessed=2 * batch * total * itemsize,
    )

    return pl.pallas_call(
        _concat_kernel,
        grid=grid,
        in_specs=in_specs,
        out_specs=out_spec,
        out_shape=jax.ShapeDtypeStruct((batch, total), out_dtype),
        compiler_params=pltpu.CompilerParams(
            dimension_semantics=("parallel",),
            vmem_limit_bytes=_VMEM_LIMIT_BYTES,
        ),
        cost_estimate=cost,
    )(*segments)


if __name__ == "__main__":
    key = jax.random.PRNGKey(0)
    k1, k2, k3 = jax.random.split(key, 3)

    B = 2
    # Small synthetic observation space consistent with a Dict space:
    #   "image":  (C=4, H=16, W=16)  -> NCHW per-sample
    #   "vector": (8,)
    #   "state":  (3, 5)
    observations = {
        "image": jax.random.normal(k1, (B, 4, 16, 16), dtype=jnp.float32),
        "vector": jax.random.normal(k2, (B, 8), dtype=jnp.float32),
        "state": jax.random.normal(k3, (B, 3, 5), dtype=jnp.float32),
    }

    out = dict_extractor_forward(observations)
    out = jax.block_until_ready(out)

    # Reference check (pure JAX, mirrors torch.cat of flattened tensors).
    ref = jnp.concatenate(
        [observations[k].reshape(B, -1) for k in observations], axis=1
    )
    assert out.shape == (B, 4 * 16 * 16 + 8 + 3 * 5), out.shape
    assert out.dtype == ref.dtype, (out.dtype, ref.dtype)
    assert jnp.allclose(out, ref), "mismatch vs reference"

    print("KERNEL_OK")
</pallas_src>

<mosaic_0001>
module attributes {stable_mosaic.version = 11 : i64} {
  func.func @_concat_kernel(%arg0: i32, %arg1: memref<2x1024xf32, #tpu.memory_space<vmem>>, %arg2: memref<2x23xf32, #tpu.memory_space<vmem>>, %arg3: memref<2x1047xf32, #tpu.memory_space<vmem>>) attributes {dimension_semantics = [#tpu.dimension_semantics<parallel>], iteration_bounds = array<i64: 1>, scalar_prefetch = 0 : i64, scratch_operands = 0 : i64, tpu.core_type = #tpu.core_type<tc>, window_params = [{transform_indices = @transform_0, window_bounds = array<i64: 2, 1024>}, {transform_indices = @transform_1, window_bounds = array<i64: 2, 23>}, {transform_indices = @transform_2, window_bounds = array<i64: 2, 1047>}]} {
    %c0 = arith.constant 0 : index
    %c0_0 = arith.constant 0 : index
    %0 = vector.load %arg1[%c0, %c0_0] : memref<2x1024xf32, #tpu.memory_space<vmem>>, vector<2x1024xf32>
    %c0_1 = arith.constant 0 : index
    %c0_2 = arith.constant 0 : index
    %1 = vector.load %arg3[%c0_1, %c0_2] : memref<2x1047xf32, #tpu.memory_space<vmem>>, vector<2x1024xf32>
    tpu.vector_store %arg3[%c0_1, %c0_2], %0 {strides = array<i32>} : memref<2x1047xf32, #tpu.memory_space<vmem>>, vector<2x1024xf32>,
    %c0_3 = arith.constant 0 : index
    %c0_4 = arith.constant 0 : index
    %2 = vector.load %arg2[%c0_3, %c0_4] : memref<2x23xf32, #tpu.memory_space<vmem>>, vector<2x23xf32>
    %c0_5 = arith.constant 0 : index
    %c1024 = arith.constant 1024 : index
    %3 = vector.load %arg3[%c0_5, %c1024] : memref<2x1047xf32, #tpu.memory_space<vmem>>, vector<2x23xf32>
    tpu.vector_store %arg3[%c0_5, %c1024], %2 {strides = array<i32>} : memref<2x1047xf32, #tpu.memory_space<vmem>>, vector<2x23xf32>,
    return
  }
  func.func @transform_0(%arg0: i32) -> (i32, i32) {
    %c0_i32 = arith.constant 0 : i32
    %c0_i32_0 = arith.constant 0 : i32
    return %arg0, %c0_i32 : i32, i32
  }
  func.func @transform_1(%arg0: i32) -> (i32, i32) {
    %c0_i32 = arith.constant 0 : i32
    %c0_i32_0 = arith.constant 0 : i32
    return %arg0, %c0_i32 : i32, i32
  }
  func.func @transform_2(%arg0: i32) -> (i32, i32) {
    %c0_i32 = arith.constant 0 : i32
    %c0_i32_0 = arith.constant 0 : i32
    return %arg0, %c0_i32 : i32, i32
  }
}

</mosaic_0001>

<llo_original>
// kernel: tpu_custom_call.1
$region0: #{tpu_custom_call.1}
  #allocation0 [shape = 'u32[]', space=smem, size = 0x4, offset = 0x4, fixed_abs, tag = 'smem constant byte address 0x4 - core index']
  #allocation1 [shape = 'u32[72,128]{1,0:T(1,128)}', space=vmem, size = 0x9000, scoped, tag = 'internal scratch']
  %s0 = inlined_call_operand.hbm [shape: f32[2,1024], index: 0, kind: input, shape index: {}]
  %s1 = inlined_call_operand.hbm [shape: f32[2,23], index: 1, kind: input, shape index: {}]
  %s2 = inlined_call_operand.hbm [shape: f32[2,1047], index: 2, kind: output, shape index: {}]
  %s3 = sld [smem:[#allocation0]]
  $region26: #{tpu_custom_call.1} parent=0
    _
  %s5 = ssub.s32 1, %s3
  %s6 = scalar_select 0, %s5, %s3
  $region1: #{tpu_custom_call.1} parent=0
    #allocation2 [shape = 'u8[8192]{0}', space=vmem, size = 0x2000, scoped, tag = 'input window, operand 0, single buffered']
    #allocation3 [shape = 's32[1]{0}', space=sflag, size = 0x4, scoped, tag = 'scoped memory for tpu_custom_call.1']
    #allocation4 [shape = 's32[1]{0}', space=sflag, size = 0x4, scoped, tag = 'scoped memory for tpu_custom_call.1']
    #allocation5 [shape = 'u8[1024]{0}', space=vmem, size = 0x400, scoped, tag = 'input window, operand 1, single buffered']
    #allocation6 [shape = 's32[1]{0}', space=sflag, size = 0x4, scoped, tag = 'scoped memory for tpu_custom_call.1']
    #allocation7 [shape = 'u8[9216]{0}', space=vmem, size = 0x2400, scoped, tag = 'output window, operand 0, single buffered']
    %7 = vsyncpa [#allocation3], 0
    %8 = vsyncpa [#allocation6], 0
    %9 = vsyncpa [#allocation4], 0
    // Predicated region
    $region2: #{tpu_custom_call.1} parent=1 // pred_check
      _
    $region3: #{tpu_custom_call.1} parent=1 // pred_check_branch
      %11 = sbr.rel (0) target = $region5
    $region4: #{tpu_custom_call.1} parent=1 // pred_region
      %13 = vsyncadd [#allocation3], 0
      %s15 = sshll.u32 %s0, 4
      %s16 = int_to_ptr.hbm [resolvable:$true] %s15
      %s17 = sshll.u32 [#allocation2], 4
      %s18 = int_to_ptr.vmem [resolvable:$true] %s17
      %20 = dma.hbm_to_vmem [thread:$0]  %s16, 256, %s18, [#allocation3]
    $region5: #{tpu_custom_call.1} parent=1 // pred_fallthru
      _
    // Predicated region
    $region6: #{tpu_custom_call.1} parent=1 // pred_check
      _
    $region7: #{tpu_custom_call.1} parent=1 // pred_check_branch
      %22 = sbr.rel (0) target = $region9
    $region8: #{tpu_custom_call.1} parent=1 // pred_region
      %24 = vsyncadd [#allocation6], 0
      %s26 = sshll.u32 %s1, 4
      %s27 = int_to_ptr.hbm [resolvable:$true] %s26
      %s28 = sshll.u32 [#allocation5], 4
      %s29 = int_to_ptr.vmem [resolvable:$true] %s28
      %31 = dma.hbm_to_vmem [thread:$0]  %s27, 32, %s29, [#allocation6]
    $region9: #{tpu_custom_call.1} parent=1 // pred_fallthru
      _
    // Predicated region
    $region10: #{tpu_custom_call.1} parent=1 // pred_check
      _
    $region11: #{tpu_custom_call.1} parent=1 // pred_check_branch
      %33 = sbr.rel (0) target = $region13
    $region12: #{tpu_custom_call.1} parent=1 // pred_region
      %35 = dma.done [#allocation3], 256
    $region13: #{tpu_custom_call.1} parent=1 // pred_fallthru
      _
    // Predicated region
    $region14: #{tpu_custom_call.1} parent=1 // pred_check
      _
    $region15: #{tpu_custom_call.1} parent=1 // pred_check_branch
      %37 = sbr.rel (0) target = $region17
    $region16: #{tpu_custom_call.1} parent=1 // pred_region
      %39 = dma.done [#allocation6], 32
    $region17: #{tpu_custom_call.1} parent=1 // pred_fallthru
      _
    %v40 = vld [vmem:[#allocation2] sm:$0xff]
    %v41 = vld [vmem:[#allocation2 + $0x8] sm:$0xff]
    %42 = vst [vmem:[#allocation7] sm:$0xff] %v40
    %43 = vst [vmem:[#allocation7 + $0x8] sm:$0xff] %v41
    %v44 = vld [vmem:[#allocation5] sm:$0x3]
    %vm45 = vcmask 181248
    %46 = vst.msk [vmem:[#allocation7 + $0x10] sm:$0x3] %vm45, %v44
    // Predicated region
    $region18: #{tpu_custom_call.1} parent=1 // pred_check
      _
    $region19: #{tpu_custom_call.1} parent=1 // pred_check_branch
      %48 = sbr.rel (0) target = $region21
    $region20: #{tpu_custom_call.1} parent=1 // pred_region
      %50 = vsyncadd [#allocation4], 0
      %s52 = sshll.u32 [#allocation7], 4
      %s53 = int_to_ptr.vmem [resolvable:$true] %s52
      %s54 = sshll.u32 %s2, 4
      %s55 = int_to_ptr.hbm [resolvable:$true] %s54
      %57 = dma.vmem_to_hbm [thread:$0]  %s53, 288, %s55, [#allocation4]
    $region21: #{tpu_custom_call.1} parent=1 // pred_fallthru
      _
    // Predicated region
    $region22: #{tpu_custom_call.1} parent=1 // pred_check
      _
    $region23: #{tpu_custom_call.1} parent=1 // pred_check_branch
      %59 = sbr.rel (0) target = $region25
    $region24: #{tpu_custom_call.1} parent=1 // pred_region
      %61 = dma.done [#allocation4], 288
    $region25: #{tpu_custom_call.1} parent=1 // pred_fallthru
      _
    %62 = vsyncpa [#allocation3], 1
    %63 = vsyncpa [#allocation6], 1
    %64 = vsyncpa [#allocation4], 1

</llo_original>
